<compile_context>
chip_gen: v7x
topology: tpu7x:2x2x1
jax: 0.10.0
libtpu: 0.0.40
codegen_flags: <defaults>
</compile_context>

<pallas_src>
import jax
import jax.numpy as jnp
from jax.experimental import pallas as pl
from jax.experimental.pallas import tpu as pltpu


def _lovasz_kernel(err_ref, gt_ref, gtsum_ref, out_ref, carry_ref):
    k = pl.program_id(0)

    @pl.when(k == 0)
    def _():
        carry_ref[...] = jnp.zeros_like(carry_ref)
        out_ref[...] = jnp.zeros_like(out_ref)

    errs = err_ref[...]                               # (Np, TK) f32, sorted desc
    gts_b = gt_ref[...]                               # (Np, TK) bf16 in {0, 1}
    gts = gts_b.astype(jnp.float32)
    gt_total = gtsum_ref[...]                         # (Np, 1) f32 = sum(gt)

    n_pad, tk = errs.shape

    # Block-local inclusive-cumsum operator, generated on-chip (no HBM traffic).
    row = jax.lax.broadcasted_iota(jnp.int32, (tk, tk), 0)
    col = jax.lax.broadcasted_iota(jnp.int32, (tk, tk), 1)
    tri = (row <= col).astype(jnp.bfloat16)

    # cum[j] = inclusive cumsum of gt_sorted up to global pixel j (exact ints).
    cum_local = jnp.dot(gts_b, tri, preferred_element_type=jnp.float32)
    cum_gt = carry_ref[...] + cum_local               # (Np, TK)

    idx_i = k * tk + jax.lax.broadcasted_iota(jnp.int32, (n_pad, tk), 1)
    idx = idx_i.astype(jnp.float32)                   # global 0-based pixel idx

    # jaccard[j] = 1 - (G - cum[j]) / (G + (j+1) - cum[j])
    inter = gt_total - cum_gt
    union = gt_total + (idx + 1.0) - cum_gt           # == G + cumsum(1-gt)[j]
    jacc = 1.0 - inter / union

    # jaccard[j-1], rebuilt elementwise via cum[j-1] = cum[j] - gt[j];
    # grad[0] = jaccard[0] handled by the j == 0 mask.
    prev_num = inter + gts
    prev_den = gt_total + idx - cum_gt + gts
    prev_jacc = jnp.where(idx_i == 0, 0.0, 1.0 - prev_num / prev_den)

    grad = jacc - prev_jacc                           # lovasz_grad
    out_ref[...] += jnp.sum(jnp.maximum(errs, 0.0) * grad,
                            axis=-1, keepdims=True)

    carry_ref[...] = cum_gt[:, tk - 1:tk]             # running gt count carry


def lovasz_hinge_loss(logits, labels, *, tile=128):
    """logits, labels: (N, 1, H, W) float arrays (labels in {0, 1})."""
    N = logits.shape[0]
    x = logits.reshape(N, -1).astype(jnp.float32)     # squeeze(1) + flatten
    y = labels.reshape(N, -1).astype(jnp.float32)
    P = x.shape[1]

    signs = 2.0 * y - 1.0
    errors = 1.0 - x * signs
    # TODO(synk): lax.sort has no Mosaic lowering; the descending sort + label
    # gather stays in JAX as ONE stable variadic sort keyed on -errors.
    _, errors_sorted, gt_sorted = jax.lax.sort(
        (-errors, errors, y), dimension=-1, num_keys=1, is_stable=True)

    gt_sum = jnp.sum(y, axis=-1, keepdims=True)       # (N, 1)

    # Pad batch to 8 sublanes and pixels to the tile size.  Padded images have
    # gt_sum == 0 and err == 0 so they contribute exactly 0; padded pixels sit
    # at the end of the descending order and contribute 0 (relu(0) == 0).
    n_pad = -(-N // 8) * 8
    p_pad = -(-P // tile) * tile
    pads = ((0, n_pad - N), (0, p_pad - P))
    errors_sorted = jnp.pad(errors_sorted, pads)
    gt_sorted = jnp.pad(gt_sorted, pads).astype(jnp.bfloat16)
    gt_sum = jnp.pad(gt_sum, ((0, n_pad - N), (0, 0)))

    per_image = pl.pallas_call(
        _lovasz_kernel,
        out_shape=jax.ShapeDtypeStruct((n_pad, 1), jnp.float32),
        grid=(p_pad // tile,),
        in_specs=[
            pl.BlockSpec((n_pad, tile), lambda k: (0, k)),
            pl.BlockSpec((n_pad, tile), lambda k: (0, k)),
            pl.BlockSpec((n_pad, 1), lambda k: (0, 0)),
        ],
        out_specs=pl.BlockSpec((n_pad, 1), lambda k: (0, 0)),
        scratch_shapes=[pltpu.VMEM((n_pad, 1), jnp.float32)],
        compiler_params=pltpu.CompilerParams(
            dimension_semantics=("arbitrary",)),
    )(errors_sorted, gt_sorted, gt_sum)

    # divide by the TRUE batch size, not the padded one
    return jnp.sum(per_image[:N, 0]) / N


def _lovasz_hinge_ref(logits, labels):
    """Pure-JAX reference mirroring PyTorch lovasz_hinge(per_image=True)."""
    N = logits.shape[0]
    x = logits.reshape(N, -1).astype(jnp.float32)
    y = labels.reshape(N, -1).astype(jnp.float32)

    def per_img(xi, yi):
        signs = 2.0 * yi - 1.0
        errors = 1.0 - xi * signs
        order = jnp.argsort(-errors)
        errors_sorted = errors[order]
        gt_sorted = yi[order]
        gts = gt_sorted.sum()
        intersection = gts - jnp.cumsum(gt_sorted)
        union = gts + jnp.cumsum(1.0 - gt_sorted)
        jaccard = 1.0 - intersection / union
        grad = jnp.concatenate([jaccard[:1], jaccard[1:] - jaccard[:-1]])
        return jnp.sum(jnp.maximum(errors_sorted, 0.0) * grad)

    return jnp.mean(jax.vmap(per_img)(x, y))


if __name__ == "__main__":
    key = jax.random.PRNGKey(0)
    k1, k2 = jax.random.split(key)
    N, H, W = 2, 16, 16
    logits = jax.random.normal(k1, (N, 1, H, W), dtype=jnp.float32)
    target = (jax.random.uniform(k2, (N, 1, H, W)) > 0.5).astype(jnp.float32)

    loss = lovasz_hinge_loss(logits, target)
    jax.block_until_ready(loss)

    ref = _lovasz_hinge_ref(logits, target)
    assert jnp.allclose(loss, ref, rtol=1e-5, atol=1e-5), (loss, ref)
    print("KERNEL_OK")
</pallas_src>

<mosaic_0001>
module attributes {stable_mosaic.version = 11 : i64} {
  func.func @_lovasz_kernel(%arg0: i32, %arg1: memref<8x128xf32, #tpu.memory_space<vmem>>, %arg2: memref<8x128xbf16, #tpu.memory_space<vmem>>, %arg3: memref<8x1xf32, #tpu.memory_space<vmem>>, %arg4: memref<8x1xf32, #tpu.memory_space<vmem>>, %arg5: memref<8x1xf32, #tpu.memory_space<vmem>>) attributes {dimension_semantics = [#tpu.dimension_semantics<arbitrary>], iteration_bounds = array<i64: 2>, scalar_prefetch = 0 : i64, scratch_operands = 1 : i64, tpu.core_type = #tpu.core_type<tc>, window_params = [{transform_indices = @transform_0, window_bounds = array<i64: 8, 128>}, {transform_indices = @transform_1, window_bounds = array<i64: 8, 128>}, {pipeline_mode = #tpu.pipeline_mode<synchronous>, transform_indices = @transform_2, window_bounds = array<i64: 8, 1>}, {pipeline_mode = #tpu.pipeline_mode<synchronous>, transform_indices = @transform_3, window_bounds = array<i64: 8, 1>}]} {
    %c0_i32 = arith.constant 0 : i32
    %0 = arith.cmpi eq, %arg0, %c0_i32 : i32
    %1 = arith.extui %0 : i1 to i32
    %c0_i32_0 = arith.constant 0 : i32
    %2 = arith.cmpi ne, %1, %c0_i32_0 : i32
    scf.if %2 {
      %cst_21 = arith.constant 0.000000e+00 : f32
      %55 = vector.broadcast %cst_21 : f32 to vector<8x1xf32>
      %c0_22 = arith.constant 0 : index
      %c0_23 = arith.constant 0 : index
      %56 = vector.load %arg5[%c0_22, %c0_23] : memref<8x1xf32, #tpu.memory_space<vmem>>, vector<8x1xf32>
      tpu.vector_store %arg5[%c0_22, %c0_23], %55 {strides = array<i32>} : memref<8x1xf32, #tpu.memory_space<vmem>>, vector<8x1xf32>,
      %cst_24 = arith.constant 0.000000e+00 : f32
      %57 = vector.broadcast %cst_24 : f32 to vector<8x1xf32>
      %c0_25 = arith.constant 0 : index
      %c0_26 = arith.constant 0 : index
      %58 = vector.load %arg4[%c0_25, %c0_26] : memref<8x1xf32, #tpu.memory_space<vmem>>, vector<8x1xf32>
      tpu.vector_store %arg4[%c0_25, %c0_26], %57 {strides = array<i32>} : memref<8x1xf32, #tpu.memory_space<vmem>>, vector<8x1xf32>,
    } else {
    }
    %c0 = arith.constant 0 : index
    %c0_1 = arith.constant 0 : index
    %3 = vector.load %arg1[%c0, %c0_1] : memref<8x128xf32, #tpu.memory_space<vmem>>, vector<8x128xf32>
    %c0_2 = arith.constant 0 : index
    %c0_3 = arith.constant 0 : index
    %4 = vector.load %arg2[%c0_2, %c0_3] : memref<8x128xbf16, #tpu.memory_space<vmem>>, vector<8x128xbf16>
    %5 = arith.extf %4 : vector<8x128xbf16> to vector<8x128xf32>
    %c0_4 = arith.constant 0 : index
    %c0_5 = arith.constant 0 : index
    %6 = vector.load %arg3[%c0_4, %c0_5] : memref<8x1xf32, #tpu.memory_space<vmem>>, vector<8x1xf32>
    %7 = tpu.iota {dimensions = array<i32: 0>} : vector<128x128xi32>
    %8 = tpu.iota {dimensions = array<i32: 1>} : vector<128x128xi32>
    %9 = arith.cmpi sle, %7, %8 : vector<128x128xi32>
    %10 = arith.extui %9 : vector<128x128xi1> to vector<128x128xi32>
    %11 = arith.sitofp %10 : vector<128x128xi32> to vector<128x128xf32>
    %12 = arith.truncf %11 : vector<128x128xf32> to vector<128x128xbf16>
    %cst = arith.constant dense<0.000000e+00> : vector<8x128xf32>
    %13 = tpu.matmul %4, %12, %cst {dimension_numbers = #tpu.dot_dimension_numbers<[1], [0], [0], [1], [0, 0, 1, 1], [], []>} : vector<8x128xbf16>, vector<128x128xbf16>, vector<8x128xf32> -> vector<8x128xf32>
    %c0_6 = arith.constant 0 : index
    %c0_7 = arith.constant 0 : index
    %14 = vector.load %arg5[%c0_6, %c0_7] : memref<8x1xf32, #tpu.memory_space<vmem>>, vector<8x1xf32>
    %15 = vector.broadcast %14 : vector<8x1xf32> to vector<8x128xf32>
    %16 = arith.addf %15, %13 : vector<8x128xf32>
    %c128_i32 = arith.constant 128 : i32
    %17 = arith.muli %arg0, %c128_i32 : i32
    %18 = tpu.iota {dimensions = array<i32: 1>} : vector<8x128xi32>
    %19 = vector.broadcast %17 : i32 to vector<8x128xi32>
    %20 = arith.addi %19, %18 : vector<8x128xi32>
    %21 = arith.sitofp %20 : vector<8x128xi32> to vector<8x128xf32>
    %22 = vector.broadcast %6 : vector<8x1xf32> to vector<8x128xf32>
    %23 = arith.subf %22, %16 : vector<8x128xf32>
    %cst_8 = arith.constant 1.000000e+00 : f32
    %24 = vector.broadcast %cst_8 : f32 to vector<8x128xf32>
    %25 = arith.addf %21, %24 : vector<8x128xf32>
    %26 = vector.broadcast %6 : vector<8x1xf32> to vector<8x128xf32>
    %27 = arith.addf %26, %25 : vector<8x128xf32>
    %28 = arith.subf %27, %16 : vector<8x128xf32>
    %29 = arith.divf %23, %28 : vector<8x128xf32>
    %cst_9 = arith.constant 1.000000e+00 : f32
    %30 = vector.broadcast %cst_9 : f32 to vector<8x128xf32>
    %31 = arith.subf %30, %29 : vector<8x128xf32>
    %32 = arith.addf %23, %5 : vector<8x128xf32>
    %33 = vector.broadcast %6 : vector<8x1xf32> to vector<8x128xf32>
    %34 = arith.addf %33, %21 : vector<8x128xf32>
    %35 = arith.subf %34, %16 : vector<8x128xf32>
    %36 = arith.addf %35, %5 : vector<8x128xf32>
    %c0_i32_10 = arith.constant 0 : i32
    %37 = vector.broadcast %c0_i32_10 : i32 to vector<8x128xi32>
    %38 = arith.cmpi eq, %20, %37 : vector<8x128xi32>
    %39 = arith.divf %32, %36 : vector<8x128xf32>
    %cst_11 = arith.constant 1.000000e+00 : f32
    %40 = vector.broadcast %cst_11 : f32 to vector<8x128xf32>
    %41 = arith.subf %40, %39 : vector<8x128xf32>
    %cst_12 = arith.constant 0.000000e+00 : f32
    %42 = vector.broadcast %cst_12 : f32 to vector<8x128xf32>
    %43 = arith.select %38, %42, %41 : vector<8x128xi1>, vector<8x128xf32>
    %44 = arith.subf %31, %43 : vector<8x128xf32>
    %c0_13 = arith.constant 0 : index
    %c0_14 = arith.constant 0 : index
    %45 = vector.load %arg4[%c0_13, %c0_14] : memref<8x1xf32, #tpu.memory_space<vmem>>, vector<8x1xf32>
    %cst_15 = arith.constant 0.000000e+00 : f32
    %46 = vector.broadcast %cst_15 : f32 to vector<8x128xf32>
    %47 = arith.maximumf %3, %46 : vector<8x128xf32>
    %48 = arith.mulf %47, %44 : vector<8x128xf32>
    %cst_16 = arith.constant dense<0.000000e+00> : vector<8xf32>
    %49 = vector.multi_reduction <add>, %48, %cst_16 [1] : vector<8x128xf32> to vector<8xf32>
    %50 = vector.shape_cast %49 : vector<8xf32> to vector<8x1xf32>
    %51 = arith.addf %45, %50 : vector<8x1xf32>
    %c0_17 = arith.constant 0 : index
    %c0_18 = arith.constant 0 : index
    %52 = vector.load %arg4[%c0_17, %c0_18] : memref<8x1xf32, #tpu.memory_space<vmem>>, vector<8x1xf32>
    tpu.vector_store %arg4[%c0_17, %c0_18], %51 {strides = array<i32>} : memref<8x1xf32, #tpu.memory_space<vmem>>, vector<8x1xf32>,
    %53 = vector.extract_strided_slice %16 {offsets = [0, 127], sizes = [8, 1], strides = [1, 1]} : vector<8x128xf32> to vector<8x1xf32>
    %c0_19 = arith.constant 0 : index
    %c0_20 = arith.constant 0 : index
    %54 = vector.load %arg5[%c0_19, %c0_20] : memref<8x1xf32, #tpu.memory_space<vmem>>, vector<8x1xf32>
    tpu.vector_store %arg5[%c0_19, %c0_20], %53 {strides = array<i32>} : memref<8x1xf32, #tpu.memory_space<vmem>>, vector<8x1xf32>,
    return
  }
  func.func @transform_0(%arg0: i32) -> (i32, i32) {
    %c0_i32 = arith.constant 0 : i32
    %c0_i32_0 = arith.constant 0 : i32
    return %c0_i32, %arg0 : i32, i32
  }
  func.func @transform_1(%arg0: i32) -> (i32, i32) {
    %c0_i32 = arith.constant 0 : i32
    %c0_i32_0 = arith.constant 0 : i32
    return %c0_i32, %arg0 : i32, i32
  }
  func.func @transform_2(%arg0: i32) -> (i32, i32) {
    %c0_i32 = arith.constant 0 : i32
    %c0_i32_0 = arith.constant 0 : i32
    %c0_i32_1 = arith.constant 0 : i32
    return %c0_i32, %c0_i32_0 : i32, i32
  }
  func.func @transform_3(%arg0: i32) -> (i32, i32) {
    %c0_i32 = arith.constant 0 : i32
    %c0_i32_0 = arith.constant 0 : i32
    %c0_i32_1 = arith.constant 0 : i32
    return %c0_i32, %c0_i32_0 : i32, i32
  }
}

</mosaic_0001>

<llo_original>
// kernel: tpu_custom_call.1
$region0: #{tpu_custom_call.1}
  #allocation0 [shape = 'u32[]', space=smem, size = 0x4, offset = 0x4, fixed_abs, tag = 'smem constant byte address 0x4 - core index']
  #allocation1 [shape = 'u32[144,128]{1,0:T(1,128)}', space=vmem, size = 0x12000, scoped, tag = 'internal scratch']
  #allocation2 [shape = 'f32[8,1]{1,0:T(8,128)}', space=vmem, size = 0x1000, scoped, tag = 'scratch operand']
  %s0 = inlined_call_operand.hbm [shape: f32[8,256], index: 0, kind: input, shape index: {}]
  %s1 = inlined_call_operand.vmem [shape: bf16[8,256], index: 1, kind: input, shape index: {}]
  %s2 = inlined_call_operand.vmem [shape: f32[8,1], index: 2, kind: input, shape index: {}]
  %s3 = inlined_call_operand.vmem [shape: f32[8,1], index: 3, kind: output, shape index: {}]
  %s4 = sld [smem:[#allocation0]]
  $region53: #{tpu_custom_call.1} parent=0
    _
  %s6 = ssub.s32 1, %s4
  %s7 = scalar_select 0, %s6, %s4
  $region1: #{tpu_custom_call.1} parent=0
    #allocation3 [shape = 'u8[8192]{0}', space=vmem, size = 0x2000, scoped, tag = 'input window, operand 0']
    #allocation4 [shape = 's32[2]{0}', space=sflag, size = 0x8, scoped, tag = 'scoped memory for tpu_custom_call.1']
    %8 = vsyncpa [#allocation4], 0
    %s9 = scalar_lea.sflag [#allocation4], 1
    %10 = vsyncpa %s9, 0
    loop: start=0, step=1, limit=4
    $region2: #{tpu_custom_call.1} parent=1 // loop_pre_header
      _
    $region3: #{tpu_custom_call.1} parent=1 // loop_header
      %s12 = sphi 0, %s16
      %p13 = scmp.ge.s32.totalorder %s12, 4
      %s22 = sphi 0, %s24
      %s25 = sphi 0, %s22
      %s26 = sphi 0, %s25
      %s42 = sphi 0, %s26
      %s48 = sphi 0, %s50
      %s51 = sphi 0, %s48
      %s52 = sphi 0, %s51
      %s68 = sphi 0, %s52
      %s72 = sphi 0, %s72
      %s74 = sphi 0, %s72
      %s75 = sphi 0, %s74
      %s89 = sphi 0, %s75
      %s93 = sphi 0, %s93
      %s95 = sphi 0, %s93
      %s96 = sphi 0, %s95
      %s110 = sphi 0, %s96
    $region4: #{tpu_custom_call.1} parent=1 // loop_header_branch
      %15 = sbr.rel (%p13) target = $region8
    $region5: #{tpu_custom_call.1} parent=1 // loop_body
      %s17 = ssub.s32 %s12, 1
      %s18 = ssub.s32 %s12, 2
      %s19 = sadd.s32 %s12, 1
      %s20 = ssub.s32 %s12, %s19
      %p21 = scmp.eq.s32.totalorder %s20, 0
      %s23 = sadd.s32 %s22, 1
      %s24 = scalar_select %p21, %s22, %s23
      %p27 = pneg %p21
      %p28 = scmp.eq.s32.totalorder %s12, 1
      %p29 = por %p27, %p28
      %p30 = scmp.ne.s32.totalorder %s22, %s25
      %p31 = scmp.eq.s32.totalorder %s12, 0
      %p32 = por %p30, %p31
      %p33 = scmp.ne.s32.totalorder %s22, %s25
      %p34 = scmp.eq.s32.totalorder %s17, 1
      %p35 = por %p33, %p34
      %p36 = scmp.ne.s32.totalorder %s25, %s26
      %p37 = scmp.eq.s32.totalorder %s17, 0
      %p38 = por %p36, %p37
      %p39 = scmp.ne.s32.totalorder %s25, %s26
      %p40 = scmp.eq.s32.totalorder %s18, 1
      %p41 = por %p39, %p40
      %p43 = scmp.ne.s32.totalorder %s26, %s42
      %p44 = scmp.eq.s32.totalorder %s18, 0
      %p45 = por %p43, %p44
      %s46 = ssub.s32 %s12, %s19
      %p47 = scmp.eq.s32.totalorder %s46, 0
      %s49 = sadd.s32 %s48, 1
      %s50 = scalar_select %p47, %s48, %s49
      %p53 = pneg %p47
      %p54 = scmp.eq.s32.totalorder %s12, 1
      %p55 = por %p53, %p54
      %p56 = scmp.ne.s32.totalorder %s48, %s51
      %p57 = scmp.eq.s32.totalorder %s12, 0
      %p58 = por %p56, %p57
      %p59 = scmp.ne.s32.totalorder %s48, %s51
      %p60 = scmp.eq.s32.totalorder %s17, 1
      %p61 = por %p59, %p60
      %p62 = scmp.ne.s32.totalorder %s51, %s52
      %p63 = scmp.eq.s32.totalorder %s17, 0
      %p64 = por %p62, %p63
      %p65 = scmp.ne.s32.totalorder %s51, %s52
      %p66 = scmp.eq.s32.totalorder %s18, 1
      %p67 = por %p65, %p66
      %p69 = scmp.ne.s32.totalorder %s52, %s68
      %p70 = scmp.eq.s32.totalorder %s18, 0
      %p71 = por %p69, %p70
      %s73 = sadd.s32 %s72, 1
      %p76 = scmp.eq.s32.totalorder %s12, 1
      %p77 = scmp.ne.s32.totalorder %s72, %s74
      %p78 = scmp.eq.s32.totalorder %s12, 0
      %p79 = por %p77, %p78
      %p80 = scmp.ne.s32.totalorder %s72, %s74
      %p81 = scmp.eq.s32.totalorder %s17, 1
      %p82 = por %p80, %p81
      %p83 = scmp.ne.s32.totalorder %s74, %s75
      %p84 = scmp.eq.s32.totalorder %s17, 0
      %p85 = por %p83, %p84
      %p86 = scmp.ne.s32.totalorder %s74, %s75
      %p87 = scmp.eq.s32.totalorder %s18, 1
      %p88 = por %p86, %p87
      %p90 = scmp.ne.s32.totalorder %s75, %s89
      %p91 = scmp.eq.s32.totalorder %s18, 0
      %p92 = por %p90, %p91
      %s94 = sadd.s32 %s93, 1
      %p97 = scmp.eq.s32.totalorder %s12, 1
      %p98 = scmp.ne.s32.totalorder %s93, %s95
      %p99 = scmp.eq.s32.totalorder %s12, 0
      %p100 = por %p98, %p99
      %p101 = scmp.ne.s32.totalorder %s93, %s95
      %p102 = scmp.eq.s32.totalorder %s17, 1
      %p103 = por %p101, %p102
      %p104 = scmp.ne.s32.totalorder %s95, %s96
      %p105 = scmp.eq.s32.totalorder %s17, 0
      %p106 = por %p104, %p105
      %p107 = scmp.ne.s32.totalorder %s95, %s96
      %p108 = scmp.eq.s32.totalorder %s18, 1
      %p109 = por %p107, %p108
      %p111 = scmp.ne.s32.totalorder %s96, %s110
      %p112 = scmp.eq.s32.totalorder %s18, 0
      %p113 = por %p111, %p112
      %p114 = scmp.le.s32.totalorder 1, %s12
      %p115 = scmp.lt.s32.totalorder %s12, 3
      %p116 = pnand %p114, %p115
      %p117 = pneg %p116
      // Predicated region
      $region9: #{tpu_custom_call.1} parent=5 // pred_check
        _
      $region10: #{tpu_custom_call.1} parent=5 // pred_check_branch
        %119 = sbr.rel (%p116) target = $region12
      $region11: #{tpu_custom_call.1} parent=5 // pred_region
        %s120 = ssub.s32 %s12, 1
        // Predicated region
        $region13: #{tpu_custom_call.1} parent=11 // pred_check
          %p121 = pneg %p85
        $region14: #{tpu_custom_call.1} parent=11 // pred_check_branch
          %123 = sbr.rel (%p121) target = $region16
        $region15: #{tpu_custom_call.1} parent=11 // pred_region
          _
        $region16: #{tpu_custom_call.1} parent=11 // pred_fallthru
          _
      $region12: #{tpu_custom_call.1} parent=5 // pred_fallthru
        _
      %p124 = scmp.lt.s32.totalorder %s12, 2
      // Predicated region
      $region17: #{tpu_custom_call.1} parent=5 // pred_check
        %p125 = pneg %p124
      $region18: #{tpu_custom_call.1} parent=5 // pred_check_branch
        %127 = sbr.rel (%p125) target = $region20
      $region19: #{tpu_custom_call.1} parent=5 // pred_region
        // Predicated region
        $region21: #{tpu_custom_call.1} parent=19 // pred_check
          %p128 = pneg %p32
        $region22: #{tpu_custom_call.1} parent=19 // pred_check_branch
          %130 = sbr.rel (%p128) target = $region24
        $region23: #{tpu_custom_call.1} parent=19 // pred_region
          %s131 = sand.u32 %s22, 1
          %s132 = scalar_lea.sflag [#allocation4], %s131
          %s133 = sand.u32 %s22, 1
          %s134 = smul.addr %s133, 8
          %s135 = scalar_lea.vmem [#allocation3], %s134
          %s137 = ssub.s32 128, 128
          %138 = vsyncadd %s132, %s137
          %s139 = smul.addr %s12, 128
          %s140 = scalar_lea.hbm %s0, %s139
          %s142 = sshll.u32 %s135, 4
          %s143 = int_to_ptr.vmem [resolvable:$true] %s142
          %145 = dma.hbm_to_vmem [thread:$0]  %s140, 128, %s143, %s132
        $region24: #{tpu_custom_call.1} parent=19 // pred_fallthru
          _
        // Predicated region
        $region25: #{tpu_custom_call.1} parent=19 // pred_check
          %p146 = pneg %p58
        $region26: #{tpu_custom_call.1} parent=19 // pred_check_branch
          %148 = sbr.rel (%p146) target = $region28
        $region27: #{tpu_custom_call.1} parent=19 // pred_region
          %p149 = scmp.lt.s32.totalorder %s12, 1
          %s150 = scalar_select %p149, %s12, 1
          %s151 = smul.addr %s150, 4
          %s152 = scalar_lea.vmem %s1, %s151
        $region28: #{tpu_custom_call.1} parent=19 // pred_fallthru
          _
      $region20: #{tpu_custom_call.1} parent=5 // pred_fallthru
        _
      %p153 = scmp.le.s32.totalorder 1, %s12
      %p154 = scmp.lt.s32.totalorder %s12, 3
      %p155 = pnand %p153, %p154
      %p156 = pneg %p155
      // Predicated region
      $region29: #{tpu_custom_call.1} parent=5 // pred_check
        _
      $region30: #{tpu_custom_call.1} parent=5 // pred_check_branch
        %158 = sbr.rel (%p155) target = $region32
      $region31: #{tpu_custom_call.1} parent=5 // pred_region
        %s159 = ssub.s32 %s12, 1
        %s160 = sand.u32 %s25, 1
        %s161 = scalar_lea.sflag [#allocation4], %s160
        %s162 = sand.u32 %s25, 1
        %s163 = smul.addr %s162, 8
        %s164 = scalar_lea.vmem [#allocation3], %s163
        // Predicated region
        $region33: #{tpu_custom_call.1} parent=31 // pred_check
          %p165 = pneg %p38
        $region34: #{tpu_custom_call.1} parent=31 // pred_check_branch
          %167 = sbr.rel (%p165) target = $region36
        $region35: #{tpu_custom_call.1} parent=31 // pred_region
          %168 = dma.done %s161, 128
        $region36: #{tpu_custom_call.1} parent=31 // pred_fallthru
          _
        %s169 = sand.u32 %s25, 1
        %s170 = scalar_lea.sflag [#allocation4], %s169
        %s171 = sand.u32 %s25, 1
        %s172 = smul.addr %s171, 8
        %s173 = scalar_lea.vmem [#allocation3], %s172
        %p174 = pneg %p38
        %p175 = pneg %p35
        %p176 = scmp.lt.s32.totalorder %s17, 1
        %s177 = scalar_select %p176, %s17, 1
        %s178 = smul.addr %s177, 4
        %s179 = scalar_lea.vmem %s1, %s178
        %p180 = pneg %p64
        %p181 = pneg %p61
        %p182 = pneg %p85
        %p183 = pneg %p82
        %p184 = pneg %p106
        %p185 = pneg %p103
        %p186 = scmp.lt.s32.totalorder %s17, 1
        %s187 = scalar_select %p186, %s17, 1
        %s188 = smul.addr %s187, 4
        %s189 = scalar_lea.vmem %s1, %s188
        %p191 = scmp.eq.s32.totalorder %s17, 0
        // Predicated region
        $region37: #{tpu_custom_call.1} parent=31 // pred_check
          %p192 = pneg %p191
        $region38: #{tpu_custom_call.1} parent=31 // pred_check_branch
          %194 = sbr.rel (%p192) target = $region40
        $region39: #{tpu_custom_call.1} parent=31 // pred_region
          %vm195 = vcmask 7168
          %196 = vst.msk [vmem:[#allocation2] sm:$0xff] %vm195, 0.0
          %197 = vst.msk [vmem:[%s3] sm:$0xff] %vm195, 0.0
        $region40: #{tpu_custom_call.1} parent=31 // pred_fallthru
          _
        %v198 = vld [vmem:[%s164] sm:$0xff]
        %v199 = vld [vmem:[%s189] sm:$0xf]
        %v200 = vunpack.c.l.bf16 %v199
        %v201 = vld [vmem:[%s2] sm:$0xff]
        %v202 = vlaneseq
        %v203 = vshrl.u32 %v202, 7
        %v204 = vadd.s32 %v203, 8
        %v205 = vadd.s32 %v203, 16
        %v206 = vadd.s32 %v203, 24
        %v207 = vadd.s32 %v203, 32
        %v208 = vadd.s32 %v203, 40
        %v209 = vadd.s32 %v203, 48
        %v210 = vadd.s32 %v203, 56
        %v211 = vadd.s32 %v203, 64
        %v212 = vadd.s32 %v203, 72
        %v213 = vadd.s32 %v203, 80
        %v214 = vadd.s32 %v203, 88
        %v215 = vadd.s32 %v203, 96
        %v216 = vadd.s32 %v203, 104
        %v217 = vadd.s32 %v203, 112
        %v218 = vadd.s32 %v203, 120
        %v219 = vlaneseq
        %v220 = vand.u32 %v219, 127
        %vm221 = vcmp.le.s32.totalorder %v203, %v220
        %vm222 = vcmp.le.s32.totalorder %v204, %v220
        %vm223 = vcmp.le.s32.totalorder %v205, %v220
        %vm224 = vcmp.le.s32.totalorder %v206, %v220
        %vm225 = vcmp.le.s32.totalorder %v207, %v220
        %vm226 = vcmp.le.s32.totalorder %v208, %v220
        %vm227 = vcmp.le.s32.totalorder %v209, %v220
        %vm228 = vcmp.le.s32.totalorder %v210, %v220
        %vm229 = vcmp.le.s32.totalorder %v211, %v220
        %vm230 = vcmp.le.s32.totalorder %v212, %v220
        %vm231 = vcmp.le.s32.totalorder %v213, %v220
        %vm232 = vcmp.le.s32.totalorder %v214, %v220
        %vm233 = vcmp.le.s32.totalorder %v215, %v220
        %vm234 = vcmp.le.s32.totalorder %v216, %v220
        %vm235 = vcmp.le.s32.totalorder %v217, %v220
        %vm236 = vcmp.le.s32.totalorder %v218, %v220
        %v237 = vsel %vm221, 1, 0
        %v238 = vsel %vm222, 1, 0
        %v239 = vsel %vm223, 1, 0
        %v240 = vsel %vm224, 1, 0
        %v241 = vsel %vm225, 1, 0
        %v242 = vsel %vm226, 1, 0
        %v243 = vsel %vm227, 1, 0
        %v244 = vsel %vm228, 1, 0
        %v245 = vsel %vm229, 1, 0
        %v246 = vsel %vm230, 1, 0
        %v247 = vsel %vm231, 1, 0
        %v248 = vsel %vm232, 1, 0
        %v249 = vsel %vm233, 1, 0
        %v250 = vsel %vm234, 1, 0
        %v251 = vsel %vm235, 1, 0
        %v252 = vsel %vm236, 1, 0
        %v253 = vcvt.s32.f32 %v237
        %v254 = vcvt.s32.f32 %v238
        %v255 = vcvt.s32.f32 %v239
        %v256 = vcvt.s32.f32 %v240
        %v257 = vcvt.s32.f32 %v241
        %v258 = vcvt.s32.f32 %v242
        %v259 = vcvt.s32.f32 %v243
        %v260 = vcvt.s32.f32 %v244
        %v261 = vcvt.s32.f32 %v245
        %v262 = vcvt.s32.f32 %v246
        %v263 = vcvt.s32.f32 %v247
        %v264 = vcvt.s32.f32 %v248
        %v265 = vcvt.s32.f32 %v249
        %v266 = vcvt.s32.f32 %v250
        %v267 = vcvt.s32.f32 %v251
        %v268 = vcvt.s32.f32 %v252
        %v269 = vpack.c.bf16 %v254, %v253
        %v270 = vpack.c.bf16 %v256, %v255
        %v271 = vpack.c.bf16 %v258, %v257
        %v272 = vpack.c.bf16 %v260, %v259
        %v273 = vpack.c.bf16 %v262, %v261
        %v274 = vpack.c.bf16 %v264, %v263
        %v275 = vpack.c.bf16 %v266, %v265
        %v276 = vpack.c.bf16 %v268, %v267
        %277 = vmatprep.subr.bf16.mxu0 0
        %278 = vmatpush1.bf16.msra.mxu0 %v269
        %279 = vmatprep.subr.bf16.mxu0 0
        %280 = vmatpush1.bf16.msra.mxu0 %v270
        %281 = vmatprep.subr.bf16.mxu0 0
        %282 = vmatpush1.bf16.msra.mxu0 %v271
        %283 = vmatprep.subr.bf16.mxu0 0
        %284 = vmatpush1.bf16.msra.mxu0 %v272
        %285 = vmatprep.subr.bf16.mxu0 0
        %286 = vmatpush1.bf16.msra.mxu0 %v273
        %287 = vmatprep.subr.bf16.mxu0 0
        %288 = vmatpush1.bf16.msra.mxu0 %v274
        %289 = vmatprep.subr.bf16.mxu0 0
        %290 = vmatpush1.bf16.msra.mxu0 %v275
        %291 = vmatprep.subr.bf16.mxu0 0
        %292 = vmatpush1.bf16.msra.mxu0 %v276
        %293 = vmatprep.subr.bf16.mxu0 0
        %294 = vmatpush1.bf16.msra.mxu0 0
        %295 = vmatprep.subr.bf16.mxu0 0
        %296 = vmatpush1.bf16.msra.mxu0 0
        %297 = vmatprep.subr.bf16.mxu0 0
        %298 = vmatpush1.bf16.msra.mxu0 0
        %299 = vmatprep.subr.bf16.mxu0 0
        %300 = vmatpush1.bf16.msra.mxu0 0
        %301 = vmatprep.subr.bf16.mxu0 0
        %302 = vmatpush1.bf16.msra.mxu0 0
        %303 = vmatprep.subr.bf16.mxu0 0
        %304 = vmatpush1.bf16.msra.mxu0 0
        %305 = vmatprep.subr.bf16.mxu0 0
        %306 = vmatpush1.bf16.msra.mxu0 0
        %307 = vmatprep.subr.bf16.mxu0 0
        %308 = vmatpush1.bf16.msra.mxu0 0
        %309 = vmatprep.mubr.bf16.mxu0 0
        %310 = vmatmul.mubr.bf16.gmra.mrb[0].mxu0 %v199
        %v311 = vpop.f32.mrb[0].mxu0
        %v312 = vadd.f32 0.0, %v311
        %v313 = vpop.f32.mrb[0].mxu0
        %v314 = vpop.f32.mrb[0].mxu0
        %v315 = vpop.f32.mrb[0].mxu0
        %316 = vdwg.mxu0
        %v317 = vld [vmem:[#allocation2] sm:$0xff]
        %319 = vset.pattern.permute.xlu0 0
        %320 = vperm.xlu0 %319, %v317
        %v321 = vpop.permute.xlu0 %320
        %v323 = vadd.f32 %v321, %v312
        %s324 = smul.u32 %s17, 128
        %v325 = vstv %s324
        %v326 = vadd.s32 %v325, %v220
        %v327 = vcvt.s32.f32 %v326
        %329 = vset.pattern.permute.xlu0 0
        %330 = vperm.xlu0 %329, %v201
        %v331 = vpop.permute.xlu0 %330
        %v333 = vsub.f32 %v331, %v323
        %v334 = vadd.f32 %v327, 1.0
        %v335 = vadd.f32 %v331, %v334
        %v336 = vsub.f32 %v335, %v323
        %v337 = vrcp.pop %v336
        %v338 = vmul.f32 %v333, %v337
        %v339 = vsub.f32 1.0, %v338
        %v340 = vadd.f32 %v333, %v200
        %v341 = vadd.f32 %v331, %v327
        %v342 = vsub.f32 %v341, %v323
        %v343 = vadd.f32 %v342, %v200
        %vm344 = vcmp.eq.s32.totalorder %v326, 0
        %v345 = vrcp.pop %v343
        %v346 = vmul.f32 %v340, %v345
        %v347 = vsub.f32 1.0, %v346
        %v348 = vsel %vm344, 0.0, %v347
        %v349 = vsub.f32 %v339, %v348
        %v350 = vld [vmem:[%s3] sm:$0xff]
        %v351 = vmax.f32 %v198, 0.0
        %v352 = vmul.f32 %v351, %v349
        %353 = vadd.xlane.f32.xlu0 %v352
        %v354 = vpop.xlane.xlu0 %353
        %v355 = vadd.f32 %v350, %v354
        %vm356 = vcmask 7168
        %357 = vst.msk [vmem:[%s3] sm:$0xff] %vm356, %v355
        %359 = vrot.lane.b32.xlu0 %v323, 1
        %v360 = vpop.permute.xlu0 %359
        %362 = vst.msk [vmem:[#allocation2] sm:$0xff] %vm356, %v360
        // Predicated region
        $region41: #{tpu_custom_call.1} parent=31 // pred_check
          %p363 = pneg %p103
        $region42: #{tpu_custom_call.1} parent=31 // pred_check_branch
          %365 = sbr.rel (%p363) target = $region44
        $region43: #{tpu_custom_call.1} parent=31 // pred_region
          _
        $region44: #{tpu_custom_call.1} parent=31 // pred_fallthru
          _
        // Predicated region
        $region45: #{tpu_custom_call.1} parent=31 // pred_check
          %p366 = pneg %p103
        $region46: #{tpu_custom_call.1} parent=31 // pred_check_branch
          %368 = sbr.rel (%p366) target = $region48
        $region47: #{tpu_custom_call.1} parent=31 // pred_region
          _
        $region48: #{tpu_custom_call.1} parent=31 // pred_fallthru
          _
      $region32: #{tpu_custom_call.1} parent=5 // pred_fallthru
        _
      %p369 = scmp.le.s32.totalorder 2, %s12
      // Predicated region
      $region49: #{tpu_custom_call.1} parent=5 // pred_check
        %p370 = pneg %p369
      $region50: #{tpu_custom_call.1} parent=5 // pred_check_branch
        %372 = sbr.rel (%p370) target = $region52
      $region51: #{tpu_custom_call.1} parent=5 // pred_region
        %s373 = ssub.s32 %s12, 2
      $region52: #{tpu_custom_call.1} parent=5 // pred_fallthru
        _
    $region6: #{tpu_custom_call.1} parent=1 // loop_footer
      %s16 = sadd.s32 1, %s12
    $region7: #{tpu_custom_call.1} parent=1 // loop_footer_branch
      %11 = sbr.rel target = $region3
    $region8: #{tpu_custom_call.1} parent=1 // loop_exit
      _
    %374 = vsyncpa [#allocation4], 1
    %s375 = scalar_lea.sflag [#allocation4], 1
    %376 = vsyncpa %s375, 1

</llo_original>
